<compile_context>
chip_gen: v5e
topology: v5e:2x2
jax: 0.10.0
libtpu: 0.0.40
codegen_flags: <defaults>
</compile_context>

<pallas_src>
import jax
import jax.numpy as jnp
from jax.experimental import pallas as pl
from jax.experimental.pallas import tpu as pltpu


def _gather_rows_kernel(ids_ref, emb_hbm_ref, out_ref, buf_ref, sem):
    """Gather one tile of embedding rows.

    ids_ref:     (n_padded,) int32 in SMEM (scalar-prefetched token ids)
    emb_hbm_ref: (vocab, d_pad) ref left in HBM (memory_space=pl.ANY)
    out_ref:     (rows_per_tile, d_pad) VMEM output block
    buf_ref:     (rows_per_tile, d_pad) VMEM scratch (DMA landing buffer)
    sem:         (1,) DMA semaphore shared by all equal-sized row copies
    """
    rows_per_tile = out_ref.shape[0]
    vocab = emb_hbm_ref.shape[0]
    base = pl.program_id(0) * rows_per_tile

    # Issue every row DMA first so they are all in flight simultaneously.
    copies = []
    for r in range(rows_per_tile):
        idx = ids_ref[base + r]
        idx = jnp.clip(idx, 0, vocab - 1)  # guard OOB ids (DMA has no check)
        cp = pltpu.make_async_copy(
            emb_hbm_ref.at[pl.ds(idx, 1), :],  # (1, d_pad) row in HBM
            buf_ref.at[pl.ds(r, 1), :],        # (1, d_pad) row of the scratch
            sem.at[0],
        )
        cp.start()
        copies.append(cp)
    # Then wait for all of them (each wait consumes one row's byte count on
    # the shared semaphore; all copies are the same size, so the last wait
    # returning implies every row has landed).
    for cp in copies:
        cp.wait()

    # Single lane-dense vector store of the whole tile into the output block.
    out_ref[...] = buf_ref[...]


def token_embedding(x, embedding_table, *, tile_tokens=256):
    """x: (batch, seq) integer token ids; embedding_table: (vocab, d_model).

    Returns (batch, seq, d_model), identical to nn.Embedding lookup.
    """
    batch, seq = x.shape
    vocab, d_model = embedding_table.shape
    dtype = embedding_table.dtype

    # Lane-dense output: pad d_model up to a multiple of 128 lanes.
    d_pad = ((d_model + 127) // 128) * 128
    emb = embedding_table
    if d_pad != d_model:
        emb = jnp.pad(embedding_table, ((0, 0), (0, d_pad - d_model)))

    n_tokens = batch * seq
    ids_flat = x.reshape(n_tokens).astype(jnp.int32)

    # Rows gathered per grid step: multiple of 8 (sublanes), capped by n_tokens.
    rows = min(tile_tokens, n_tokens)
    rows = max(8, (rows // 8) * 8)
    num_tiles = -(-n_tokens // rows)
    n_padded = num_tiles * rows
    if n_padded != n_tokens:
        # Padded tokens gather row 0 and are sliced off below.
        ids_flat = jnp.pad(ids_flat, (0, n_padded - n_tokens))

    out_flat = pl.pallas_call(
        _gather_rows_kernel,
        out_shape=jax.ShapeDtypeStruct((n_padded, d_pad), dtype),
        grid_spec=pltpu.PrefetchScalarGridSpec(
            num_scalar_prefetch=1,                          # ids -> SMEM
            grid=(num_tiles,),
            in_specs=[pl.BlockSpec(memory_space=pl.ANY)],   # table stays in HBM
            out_specs=pl.BlockSpec((rows, d_pad), lambda i, ids: (i, 0)),
            scratch_shapes=[
                pltpu.VMEM((rows, d_pad), dtype),           # DMA landing buffer
                pltpu.SemaphoreType.DMA((1,)),
            ],
        ),
        compiler_params=pltpu.CompilerParams(
            dimension_semantics=("parallel",),              # megacore on v7x
        ),
    )(ids_flat, emb)

    return out_flat[:n_tokens, :d_model].reshape(batch, seq, d_model)


if __name__ == "__main__":
    # Small shapes consistent with the module's forward.
    batch, seq = 2, 8
    vocab_size, d_model = 64, 32

    key = jax.random.PRNGKey(0)
    k_emb, k_ids = jax.random.split(key)

    # nn.Embedding default init: N(0, 1)
    embedding_table = jax.random.normal(k_emb, (vocab_size, d_model), jnp.float32)
    x = jax.random.randint(k_ids, (batch, seq), 0, vocab_size, jnp.int32)

    out = token_embedding(x, embedding_table)
    out = jax.block_until_ready(out)

    # Reference: plain gather (what nn.Embedding does).
    ref = jnp.take(embedding_table, x.reshape(-1), axis=0).reshape(batch, seq, d_model)

    assert out.shape == (batch, seq, d_model)
    assert out.dtype == jnp.float32
    assert jnp.allclose(out, ref, atol=1e-6), "mismatch vs reference gather"
    print("KERNEL_OK")
</pallas_src>

<mosaic_0001>
module attributes {stable_mosaic.version = 11 : i64} {
  func.func @_gather_rows_kernel(%arg0: i32, %arg1: memref<16xi32, #tpu.memory_space<smem>>, %arg2: memref<64x128xf32, #tpu.memory_space<any>>, %arg3: memref<16x128xf32, #tpu.memory_space<vmem>>, %arg4: memref<16x128xf32, #tpu.memory_space<vmem>>, %arg5: memref<1x!tpu.dma_semaphore, #tpu.memory_space<semaphore_mem>>) attributes {dimension_semantics = [#tpu.dimension_semantics<parallel>], iteration_bounds = array<i64: 1>, scalar_prefetch = 1 : i64, scratch_operands = 2 : i64, tpu.core_type = #tpu.core_type<tc>, window_params = [{}, {transform_indices = @transform_1, window_bounds = array<i64: 16, 128>}]} {
    %c16_i32 = arith.constant 16 : i32
    %0 = arith.muli %arg0, %c16_i32 : i32
    %c0_i32 = arith.constant 0 : i32
    %1 = arith.addi %0, %c0_i32 : i32
    %2 = arith.index_cast %1 : i32 to index
    %3 = memref.load %arg1[%2] : memref<16xi32, #tpu.memory_space<smem>>
    %c0_i32_0 = arith.constant 0 : i32
    %c63_i32 = arith.constant 63 : i32
    %4 = arith.maxsi %c0_i32_0, %3 : i32
    %5 = arith.minsi %c63_i32, %4 : i32
    %c0_i32_1 = arith.constant 0 : i32
    %c0_i32_2 = arith.constant 0 : i32
    %6 = tpu.memref_slice %arg2[%5, %c0_i32_2] : memref<64x128xf32, #tpu.memory_space<any>> -> memref<1x128xf32, #tpu.memory_space<any>>
    %c0_i32_3 = arith.constant 0 : i32
    %c0_i32_4 = arith.constant 0 : i32
    %7 = tpu.memref_slice %arg4[%c0_i32_3, %c0_i32_4] : memref<16x128xf32, #tpu.memory_space<vmem>> -> memref<1x128xf32, #tpu.memory_space<vmem>>
    %8 = tpu.memref_slice %arg5[%c0_i32_1] : memref<1x!tpu.dma_semaphore, #tpu.memory_space<semaphore_mem>> -> memref<1x!tpu.dma_semaphore, #tpu.memory_space<semaphore_mem>>
    %9 = tpu.memref_squeeze %8 : memref<1x!tpu.dma_semaphore, #tpu.memory_space<semaphore_mem>> -> memref<!tpu.dma_semaphore, #tpu.memory_space<semaphore_mem>>
    tpu.enqueue_dma source(%6 : memref<1x128xf32, #tpu.memory_space<any>>) target(%7 : memref<1x128xf32, #tpu.memory_space<vmem>>) target_semaphore(%9 : memref<!tpu.dma_semaphore, #tpu.memory_space<semaphore_mem>>)
    %c1_i32 = arith.constant 1 : i32
    %10 = arith.addi %0, %c1_i32 : i32
    %11 = arith.index_cast %10 : i32 to index
    %12 = memref.load %arg1[%11] : memref<16xi32, #tpu.memory_space<smem>>
    %c0_i32_5 = arith.constant 0 : i32
    %c63_i32_6 = arith.constant 63 : i32
    %13 = arith.maxsi %c0_i32_5, %12 : i32
    %14 = arith.minsi %c63_i32_6, %13 : i32
    %c0_i32_7 = arith.constant 0 : i32
    %c0_i32_8 = arith.constant 0 : i32
    %15 = tpu.memref_slice %arg2[%14, %c0_i32_8] : memref<64x128xf32, #tpu.memory_space<any>> -> memref<1x128xf32, #tpu.memory_space<any>>
    %c1_i32_9 = arith.constant 1 : i32
    %c0_i32_10 = arith.constant 0 : i32
    %16 = tpu.memref_slice %arg4[%c1_i32_9, %c0_i32_10] : memref<16x128xf32, #tpu.memory_space<vmem>> -> memref<1x128xf32, #tpu.memory_space<vmem>>
    %17 = tpu.memref_slice %arg5[%c0_i32_7] : memref<1x!tpu.dma_semaphore, #tpu.memory_space<semaphore_mem>> -> memref<1x!tpu.dma_semaphore, #tpu.memory_space<semaphore_mem>>
    %18 = tpu.memref_squeeze %17 : memref<1x!tpu.dma_semaphore, #tpu.memory_space<semaphore_mem>> -> memref<!tpu.dma_semaphore, #tpu.memory_space<semaphore_mem>>
    tpu.enqueue_dma source(%15 : memref<1x128xf32, #tpu.memory_space<any>>) target(%16 : memref<1x128xf32, #tpu.memory_space<vmem>>) target_semaphore(%18 : memref<!tpu.dma_semaphore, #tpu.memory_space<semaphore_mem>>)
    %c2_i32 = arith.constant 2 : i32
    %19 = arith.addi %0, %c2_i32 : i32
    %20 = arith.index_cast %19 : i32 to index
    %21 = memref.load %arg1[%20] : memref<16xi32, #tpu.memory_space<smem>>
    %c0_i32_11 = arith.constant 0 : i32
    %c63_i32_12 = arith.constant 63 : i32
    %22 = arith.maxsi %c0_i32_11, %21 : i32
    %23 = arith.minsi %c63_i32_12, %22 : i32
    %c0_i32_13 = arith.constant 0 : i32
    %c0_i32_14 = arith.constant 0 : i32
    %24 = tpu.memref_slice %arg2[%23, %c0_i32_14] : memref<64x128xf32, #tpu.memory_space<any>> -> memref<1x128xf32, #tpu.memory_space<any>>
    %c2_i32_15 = arith.constant 2 : i32
    %c0_i32_16 = arith.constant 0 : i32
    %25 = tpu.memref_slice %arg4[%c2_i32_15, %c0_i32_16] : memref<16x128xf32, #tpu.memory_space<vmem>> -> memref<1x128xf32, #tpu.memory_space<vmem>>
    %26 = tpu.memref_slice %arg5[%c0_i32_13] : memref<1x!tpu.dma_semaphore, #tpu.memory_space<semaphore_mem>> -> memref<1x!tpu.dma_semaphore, #tpu.memory_space<semaphore_mem>>
    %27 = tpu.memref_squeeze %26 : memref<1x!tpu.dma_semaphore, #tpu.memory_space<semaphore_mem>> -> memref<!tpu.dma_semaphore, #tpu.memory_space<semaphore_mem>>
    tpu.enqueue_dma source(%24 : memref<1x128xf32, #tpu.memory_space<any>>) target(%25 : memref<1x128xf32, #tpu.memory_space<vmem>>) target_semaphore(%27 : memref<!tpu.dma_semaphore, #tpu.memory_space<semaphore_mem>>)
    %c3_i32 = arith.constant 3 : i32
    %28 = arith.addi %0, %c3_i32 : i32
    %29 = arith.index_cast %28 : i32 to index
    %30 = memref.load %arg1[%29] : memref<16xi32, #tpu.memory_space<smem>>
    %c0_i32_17 = arith.constant 0 : i32
    %c63_i32_18 = arith.constant 63 : i32
    %31 = arith.maxsi %c0_i32_17, %30 : i32
    %32 = arith.minsi %c63_i32_18, %31 : i32
    %c0_i32_19 = arith.constant 0 : i32
    %c0_i32_20 = arith.constant 0 : i32
    %33 = tpu.memref_slice %arg2[%32, %c0_i32_20] : memref<64x128xf32, #tpu.memory_space<any>> -> memref<1x128xf32, #tpu.memory_space<any>>
    %c3_i32_21 = arith.constant 3 : i32
    %c0_i32_22 = arith.constant 0 : i32
    %34 = tpu.memref_slice %arg4[%c3_i32_21, %c0_i32_22] : memref<16x128xf32, #tpu.memory_space<vmem>> -> memref<1x128xf32, #tpu.memory_space<vmem>>
    %35 = tpu.memref_slice %arg5[%c0_i32_19] : memref<1x!tpu.dma_semaphore, #tpu.memory_space<semaphore_mem>> -> memref<1x!tpu.dma_semaphore, #tpu.memory_space<semaphore_mem>>
    %36 = tpu.memref_squeeze %35 : memref<1x!tpu.dma_semaphore, #tpu.memory_space<semaphore_mem>> -> memref<!tpu.dma_semaphore, #tpu.memory_space<semaphore_mem>>
    tpu.enqueue_dma source(%33 : memref<1x128xf32, #tpu.memory_space<any>>) target(%34 : memref<1x128xf32, #tpu.memory_space<vmem>>) target_semaphore(%36 : memref<!tpu.dma_semaphore, #tpu.memory_space<semaphore_mem>>)
    %c4_i32 = arith.constant 4 : i32
    %37 = arith.addi %0, %c4_i32 : i32
    %38 = arith.index_cast %37 : i32 to index
    %39 = memref.load %arg1[%38] : memref<16xi32, #tpu.memory_space<smem>>
    %c0_i32_23 = arith.constant 0 : i32
    %c63_i32_24 = arith.constant 63 : i32
    %40 = arith.maxsi %c0_i32_23, %39 : i32
    %41 = arith.minsi %c63_i32_24, %40 : i32
    %c0_i32_25 = arith.constant 0 : i32
    %c0_i32_26 = arith.constant 0 : i32
    %42 = tpu.memref_slice %arg2[%41, %c0_i32_26] : memref<64x128xf32, #tpu.memory_space<any>> -> memref<1x128xf32, #tpu.memory_space<any>>
    %c4_i32_27 = arith.constant 4 : i32
    %c0_i32_28 = arith.constant 0 : i32
    %43 = tpu.memref_slice %arg4[%c4_i32_27, %c0_i32_28] : memref<16x128xf32, #tpu.memory_space<vmem>> -> memref<1x128xf32, #tpu.memory_space<vmem>>
    %44 = tpu.memref_slice %arg5[%c0_i32_25] : memref<1x!tpu.dma_semaphore, #tpu.memory_space<semaphore_mem>> -> memref<1x!tpu.dma_semaphore, #tpu.memory_space<semaphore_mem>>
    %45 = tpu.memref_squeeze %44 : memref<1x!tpu.dma_semaphore, #tpu.memory_space<semaphore_mem>> -> memref<!tpu.dma_semaphore, #tpu.memory_space<semaphore_mem>>
    tpu.enqueue_dma source(%42 : memref<1x128xf32, #tpu.memory_space<any>>) target(%43 : memref<1x128xf32, #tpu.memory_space<vmem>>) target_semaphore(%45 : memref<!tpu.dma_semaphore, #tpu.memory_space<semaphore_mem>>)
    %c5_i32 = arith.constant 5 : i32
    %46 = arith.addi %0, %c5_i32 : i32
    %47 = arith.index_cast %46 : i32 to index
    %48 = memref.load %arg1[%47] : memref<16xi32, #tpu.memory_space<smem>>
    %c0_i32_29 = arith.constant 0 : i32
    %c63_i32_30 = arith.constant 63 : i32
    %49 = arith.maxsi %c0_i32_29, %48 : i32
    %50 = arith.minsi %c63_i32_30, %49 : i32
    %c0_i32_31 = arith.constant 0 : i32
    %c0_i32_32 = arith.constant 0 : i32
    %51 = tpu.memref_slice %arg2[%50, %c0_i32_32] : memref<64x128xf32, #tpu.memory_space<any>> -> memref<1x128xf32, #tpu.memory_space<any>>
    %c5_i32_33 = arith.constant 5 : i32
    %c0_i32_34 = arith.constant 0 : i32
    %52 = tpu.memref_slice %arg4[%c5_i32_33, %c0_i32_34] : memref<16x128xf32, #tpu.memory_space<vmem>> -> memref<1x128xf32, #tpu.memory_space<vmem>>
    %53 = tpu.memref_slice %arg5[%c0_i32_31] : memref<1x!tpu.dma_semaphore, #tpu.memory_space<semaphore_mem>> -> memref<1x!tpu.dma_semaphore, #tpu.memory_space<semaphore_mem>>
    %54 = tpu.memref_squeeze %53 : memref<1x!tpu.dma_semaphore, #tpu.memory_space<semaphore_mem>> -> memref<!tpu.dma_semaphore, #tpu.memory_space<semaphore_mem>>
    tpu.enqueue_dma source(%51 : memref<1x128xf32, #tpu.memory_space<any>>) target(%52 : memref<1x128xf32, #tpu.memory_space<vmem>>) target_semaphore(%54 : memref<!tpu.dma_semaphore, #tpu.memory_space<semaphore_mem>>)
    %c6_i32 = arith.constant 6 : i32
    %55 = arith.addi %0, %c6_i32 : i32
    %56 = arith.index_cast %55 : i32 to index
    %57 = memref.load %arg1[%56] : memref<16xi32, #tpu.memory_space<smem>>
    %c0_i32_35 = arith.constant 0 : i32
    %c63_i32_36 = arith.constant 63 : i32
    %58 = arith.maxsi %c0_i32_35, %57 : i32
    %59 = arith.minsi %c63_i32_36, %58 : i32
    %c0_i32_37 = arith.constant 0 : i32
    %c0_i32_38 = arith.constant 0 : i32
    %60 = tpu.memref_slice %arg2[%59, %c0_i32_38] : memref<64x128xf32, #tpu.memory_space<any>> -> memref<1x128xf32, #tpu.memory_space<any>>
    %c6_i32_39 = arith.constant 6 : i32
    %c0_i32_40 = arith.constant 0 : i32
    %61 = tpu.memref_slice %arg4[%c6_i32_39, %c0_i32_40] : memref<16x128xf32, #tpu.memory_space<vmem>> -> memref<1x128xf32, #tpu.memory_space<vmem>>
    %62 = tpu.memref_slice %arg5[%c0_i32_37] : memref<1x!tpu.dma_semaphore, #tpu.memory_space<semaphore_mem>> -> memref<1x!tpu.dma_semaphore, #tpu.memory_space<semaphore_mem>>
    %63 = tpu.memref_squeeze %62 : memref<1x!tpu.dma_semaphore, #tpu.memory_space<semaphore_mem>> -> memref<!tpu.dma_semaphore, #tpu.memory_space<semaphore_mem>>
    tpu.enqueue_dma source(%60 : memref<1x128xf32, #tpu.memory_space<any>>) target(%61 : memref<1x128xf32, #tpu.memory_space<vmem>>) target_semaphore(%63 : memref<!tpu.dma_semaphore, #tpu.memory_space<semaphore_mem>>)
    %c7_i32 = arith.constant 7 : i32
    %64 = arith.addi %0, %c7_i32 : i32
    %65 = arith.index_cast %64 : i32 to index
    %66 = memref.load %arg1[%65] : memref<16xi32, #tpu.memory_space<smem>>
    %c0_i32_41 = arith.constant 0 : i32
    %c63_i32_42 = arith.constant 63 : i32
    %67 = arith.maxsi %c0_i32_41, %66 : i32
    %68 = arith.minsi %c63_i32_42, %67 : i32
    %c0_i32_43 = arith.constant 0 : i32
    %c0_i32_44 = arith.constant 0 : i32
    %69 = tpu.memref_slice %arg2[%68, %c0_i32_44] : memref<64x128xf32, #tpu.memory_space<any>> -> memref<1x128xf32, #tpu.memory_space<any>>
    %c7_i32_45 = arith.constant 7 : i32
    %c0_i32_46 = arith.constant 0 : i32
    %70 = tpu.memref_slice %arg4[%c7_i32_45, %c0_i32_46] : memref<16x128xf32, #tpu.memory_space<vmem>> -> memref<1x128xf32, #tpu.memory_space<vmem>>
    %71 = tpu.memref_slice %arg5[%c0_i32_43] : memref<1x!tpu.dma_semaphore, #tpu.memory_space<semaphore_mem>> -> memref<1x!tpu.dma_semaphore, #tpu.memory_space<semaphore_mem>>
    %72 = tpu.memref_squeeze %71 : memref<1x!tpu.dma_semaphore, #tpu.memory_space<semaphore_mem>> -> memref<!tpu.dma_semaphore, #tpu.memory_space<semaphore_mem>>
    tpu.enqueue_dma source(%69 : memref<1x128xf32, #tpu.memory_space<any>>) target(%70 : memref<1x128xf32, #tpu.memory_space<vmem>>) target_semaphore(%72 : memref<!tpu.dma_semaphore, #tpu.memory_space<semaphore_mem>>)
    %c8_i32 = arith.constant 8 : i32
    %73 = arith.addi %0, %c8_i32 : i32
    %74 = arith.index_cast %73 : i32 to index
    %75 = memref.load %arg1[%74] : memref<16xi32, #tpu.memory_space<smem>>
    %c0_i32_47 = arith.constant 0 : i32
    %c63_i32_48 = arith.constant 63 : i32
    %76 = arith.maxsi %c0_i32_47, %75 : i32
    %77 = arith.minsi %c63_i32_48, %76 : i32
    %c0_i32_49 = arith.constant 0 : i32
    %c0_i32_50 = arith.constant 0 : i32
    %78 = tpu.memref_slice %arg2[%77, %c0_i32_50] : memref<64x128xf32, #tpu.memory_space<any>> -> memref<1x128xf32, #tpu.memory_space<any>>
    %c8_i32_51 = arith.constant 8 : i32
    %c0_i32_52 = arith.constant 0 : i32
    %79 = tpu.memref_slice %arg4[%c8_i32_51, %c0_i32_52] : memref<16x128xf32, #tpu.memory_space<vmem>> -> memref<1x128xf32, #tpu.memory_space<vmem>>
    %80 = tpu.memref_slice %arg5[%c0_i32_49] : memref<1x!tpu.dma_semaphore, #tpu.memory_space<semaphore_mem>> -> memref<1x!tpu.dma_semaphore, #tpu.memory_space<semaphore_mem>>
    %81 = tpu.memref_squeeze %80 : memref<1x!tpu.dma_semaphore, #tpu.memory_space<semaphore_mem>> -> memref<!tpu.dma_semaphore, #tpu.memory_space<semaphore_mem>>
    tpu.enqueue_dma source(%78 : memref<1x128xf32, #tpu.memory_space<any>>) target(%79 : memref<1x128xf32, #tpu.memory_space<vmem>>) target_semaphore(%81 : memref<!tpu.dma_semaphore, #tpu.memory_space<semaphore_mem>>)
    %c9_i32 = arith.constant 9 : i32
    %82 = arith.addi %0, %c9_i32 : i32
    %83 = arith.index_cast %82 : i32 to index
    %84 = memref.load %arg1[%83] : memref<16xi32, #tpu.memory_space<smem>>
    %c0_i32_53 = arith.constant 0 : i32
    %c63_i32_54 = arith.constant 63 : i32
    %85 = arith.maxsi %c0_i32_53, %84 : i32
    %86 = arith.minsi %c63_i32_54, %85 : i32
    %c0_i32_55 = arith.constant 0 : i32
    %c0_i32_56 = arith.constant 0 : i32
    %87 = tpu.memref_slice %arg2[%86, %c0_i32_56] : memref<64x128xf32, #tpu.memory_space<any>> -> memref<1x128xf32, #tpu.memory_space<any>>
    %c9_i32_57 = arith.constant 9 : i32
    %c0_i32_58 = arith.constant 0 : i32
    %88 = tpu.memref_slice %arg4[%c9_i32_57, %c0_i32_58] : memref<16x128xf32, #tpu.memory_space<vmem>> -> memref<1x128xf32, #tpu.memory_space<vmem>>
    %89 = tpu.memref_slice %arg5[%c0_i32_55] : memref<1x!tpu.dma_semaphore, #tpu.memory_space<semaphore_mem>> -> memref<1x!tpu.dma_semaphore, #tpu.memory_space<semaphore_mem>>
    %90 = tpu.memref_squeeze %89 : memref<1x!tpu.dma_semaphore, #tpu.memory_space<semaphore_mem>> -> memref<!tpu.dma_semaphore, #tpu.memory_space<semaphore_mem>>
    tpu.enqueue_dma source(%87 : memref<1x128xf32, #tpu.memory_space<any>>) target(%88 : memref<1x128xf32, #tpu.memory_space<vmem>>) target_semaphore(%90 : memref<!tpu.dma_semaphore, #tpu.memory_space<semaphore_mem>>)
    %c10_i32 = arith.constant 10 : i32
    %91 = arith.addi %0, %c10_i32 : i32
    %92 = arith.index_cast %91 : i32 to index
    %93 = memref.load %arg1[%92] : memref<16xi32, #tpu.memory_space<smem>>
    %c0_i32_59 = arith.constant 0 : i32
    %c63_i32_60 = arith.constant 63 : i32
    %94 = arith.maxsi %c0_i32_59, %93 : i32
    %95 = arith.minsi %c63_i32_60, %94 : i32
    %c0_i32_61 = arith.constant 0 : i32
    %c0_i32_62 = arith.constant 0 : i32
    %96 = tpu.memref_slice %arg2[%95, %c0_i32_62] : memref<64x128xf32, #tpu.memory_space<any>> -> memref<1x128xf32, #tpu.memory_space<any>>
    %c10_i32_63 = arith.constant 10 : i32
    %c0_i32_64 = arith.constant 0 : i32
    %97 = tpu.memref_slice %arg4[%c10_i32_63, %c0_i32_64] : memref<16x128xf32, #tpu.memory_space<vmem>> -> memref<1x128xf32, #tpu.memory_space<vmem>>
    %98 = tpu.memref_slice %arg5[%c0_i32_61] : memref<1x!tpu.dma_semaphore, #tpu.memory_space<semaphore_mem>> -> memref<1x!tpu.dma_semaphore, #tpu.memory_space<semaphore_mem>>
    %99 = tpu.memref_squeeze %98 : memref<1x!tpu.dma_semaphore, #tpu.memory_space<semaphore_mem>> -> memref<!tpu.dma_semaphore, #tpu.memory_space<semaphore_mem>>
    tpu.enqueue_dma source(%96 : memref<1x128xf32, #tpu.memory_space<any>>) target(%97 : memref<1x128xf32, #tpu.memory_space<vmem>>) target_semaphore(%99 : memref<!tpu.dma_semaphore, #tpu.memory_space<semaphore_mem>>)
    %c11_i32 = arith.constant 11 : i32
    %100 = arith.addi %0, %c11_i32 : i32
    %101 = arith.index_cast %100 : i32 to index
    %102 = memref.load %arg1[%101] : memref<16xi32, #tpu.memory_space<smem>>
    %c0_i32_65 = arith.constant 0 : i32
    %c63_i32_66 = arith.constant 63 : i32
    %103 = arith.maxsi %c0_i32_65, %102 : i32
    %104 = arith.minsi %c63_i32_66, %103 : i32
    %c0_i32_67 = arith.constant 0 : i32
    %c0_i32_68 = arith.constant 0 : i32
    %105 = tpu.memref_slice %arg2[%104, %c0_i32_68] : memref<64x128xf32, #tpu.memory_space<any>> -> memref<1x128xf32, #tpu.memory_space<any>>
    %c11_i32_69 = arith.constant 11 : i32
    %c0_i32_70 = arith.constant 0 : i32
    %106 = tpu.memref_slice %arg4[%c11_i32_69, %c0_i32_70] : memref<16x128xf32, #tpu.memory_space<vmem>> -> memref<1x128xf32, #tpu.memory_space<vmem>>
    %107 = tpu.memref_slice %arg5[%c0_i32_67] : memref<1x!tpu.dma_semaphore, #tpu.memory_space<semaphore_mem>> -> memref<1x!tpu.dma_semaphore, #tpu.memory_space<semaphore_mem>>
    %108 = tpu.memref_squeeze %107 : memref<1x!tpu.dma_semaphore, #tpu.memory_space<semaphore_mem>> -> memref<!tpu.dma_semaphore, #tpu.memory_space<semaphore_mem>>
    tpu.enqueue_dma source(%105 : memref<1x128xf32, #tpu.memory_space<any>>) target(%106 : memref<1x128xf32, #tpu.memory_space<vmem>>) target_semaphore(%108 : memref<!tpu.dma_semaphore, #tpu.memory_space<semaphore_mem>>)
    %c12_i32 = arith.constant 12 : i32
    %109 = arith.addi %0, %c12_i32 : i32
    %110 = arith.index_cast %109 : i32 to index
    %111 = memref.load %arg1[%110] : memref<16xi32, #tpu.memory_space<smem>>
    %c0_i32_71 = arith.constant 0 : i32
    %c63_i32_72 = arith.constant 63 : i32
    %112 = arith.maxsi %c0_i32_71, %111 : i32
    %113 = arith.minsi %c63_i32_72, %112 : i32
    %c0_i32_73 = arith.constant 0 : i32
    %c0_i32_74 = arith.constant 0 : i32
    %114 = tpu.memref_slice %arg2[%113, %c0_i32_74] : memref<64x128xf32, #tpu.memory_space<any>> -> memref<1x128xf32, #tpu.memory_space<any>>
    %c12_i32_75 = arith.constant 12 : i32
    %c0_i32_76 = arith.constant 0 : i32
    %115 = tpu.memref_slice %arg4[%c12_i32_75, %c0_i32_76] : memref<16x128xf32, #tpu.memory_space<vmem>> -> memref<1x128xf32, #tpu.memory_space<vmem>>
    %116 = tpu.memref_slice %arg5[%c0_i32_73] : memref<1x!tpu.dma_semaphore, #tpu.memory_space<semaphore_mem>> -> memref<1x!tpu.dma_semaphore, #tpu.memory_space<semaphore_mem>>
    %117 = tpu.memref_squeeze %116 : memref<1x!tpu.dma_semaphore, #tpu.memory_space<semaphore_mem>> -> memref<!tpu.dma_semaphore, #tpu.memory_space<semaphore_mem>>
    tpu.enqueue_dma source(%114 : memref<1x128xf32, #tpu.memory_space<any>>) target(%115 : memref<1x128xf32, #tpu.memory_space<vmem>>) target_semaphore(%117 : memref<!tpu.dma_semaphore, #tpu.memory_space<semaphore_mem>>)
    %c13_i32 = arith.constant 13 : i32
    %118 = arith.addi %0, %c13_i32 : i32
    %119 = arith.index_cast %118 : i32 to index
    %120 = memref.load %arg1[%119] : memref<16xi32, #tpu.memory_space<smem>>
    %c0_i32_77 = arith.constant 0 : i32
    %c63_i32_78 = arith.constant 63 : i32
    %121 = arith.maxsi %c0_i32_77, %120 : i32
    %122 = arith.minsi %c63_i32_78, %121 : i32
    %c0_i32_79 = arith.constant 0 : i32
    %c0_i32_80 = arith.constant 0 : i32
    %123 = tpu.memref_slice %arg2[%122, %c0_i32_80] : memref<64x128xf32, #tpu.memory_space<any>> -> memref<1x128xf32, #tpu.memory_space<any>>
    %c13_i32_81 = arith.constant 13 : i32
    %c0_i32_82 = arith.constant 0 : i32
    %124 = tpu.memref_slice %arg4[%c13_i32_81, %c0_i32_82] : memref<16x128xf32, #tpu.memory_space<vmem>> -> memref<1x128xf32, #tpu.memory_space<vmem>>
    %125 = tpu.memref_slice %arg5[%c0_i32_79] : memref<1x!tpu.dma_semaphore, #tpu.memory_space<semaphore_mem>> -> memref<1x!tpu.dma_semaphore, #tpu.memory_space<semaphore_mem>>
    %126 = tpu.memref_squeeze %125 : memref<1x!tpu.dma_semaphore, #tpu.memory_space<semaphore_mem>> -> memref<!tpu.dma_semaphore, #tpu.memory_space<semaphore_mem>>
    tpu.enqueue_dma source(%123 : memref<1x128xf32, #tpu.memory_space<any>>) target(%124 : memref<1x128xf32, #tpu.memory_space<vmem>>) target_semaphore(%126 : memref<!tpu.dma_semaphore, #tpu.memory_space<semaphore_mem>>)
    %c14_i32 = arith.constant 14 : i32
    %127 = arith.addi %0, %c14_i32 : i32
    %128 = arith.index_cast %127 : i32 to index
    %129 = memref.load %arg1[%128] : memref<16xi32, #tpu.memory_space<smem>>
    %c0_i32_83 = arith.constant 0 : i32
    %c63_i32_84 = arith.constant 63 : i32
    %130 = arith.maxsi %c0_i32_83, %129 : i32
    %131 = arith.minsi %c63_i32_84, %130 : i32
    %c0_i32_85 = arith.constant 0 : i32
    %c0_i32_86 = arith.constant 0 : i32
    %132 = tpu.memref_slice %arg2[%131, %c0_i32_86] : memref<64x128xf32, #tpu.memory_space<any>> -> memref<1x128xf32, #tpu.memory_space<any>>
    %c14_i32_87 = arith.constant 14 : i32
    %c0_i32_88 = arith.constant 0 : i32
    %133 = tpu.memref_slice %arg4[%c14_i32_87, %c0_i32_88] : memref<16x128xf32, #tpu.memory_space<vmem>> -> memref<1x128xf32, #tpu.memory_space<vmem>>
    %134 = tpu.memref_slice %arg5[%c0_i32_85] : memref<1x!tpu.dma_semaphore, #tpu.memory_space<semaphore_mem>> -> memref<1x!tpu.dma_semaphore, #tpu.memory_space<semaphore_mem>>
    %135 = tpu.memref_squeeze %134 : memref<1x!tpu.dma_semaphore, #tpu.memory_space<semaphore_mem>> -> memref<!tpu.dma_semaphore, #tpu.memory_space<semaphore_mem>>
    tpu.enqueue_dma source(%132 : memref<1x128xf32, #tpu.memory_space<any>>) target(%133 : memref<1x128xf32, #tpu.memory_space<vmem>>) target_semaphore(%135 : memref<!tpu.dma_semaphore, #tpu.memory_space<semaphore_mem>>)
    %c15_i32 = arith.constant 15 : i32
    %136 = arith.addi %0, %c15_i32 : i32
    %137 = arith.index_cast %136 : i32 to index
    %138 = memref.load %arg1[%137] : memref<16xi32, #tpu.memory_space<smem>>
    %c0_i32_89 = arith.constant 0 : i32
    %c63_i32_90 = arith.constant 63 : i32
    %139 = arith.maxsi %c0_i32_89, %138 : i32
    %140 = arith.minsi %c63_i32_90, %139 : i32
    %c0_i32_91 = arith.constant 0 : i32
    %c0_i32_92 = arith.constant 0 : i32
    %141 = tpu.memref_slice %arg2[%140, %c0_i32_92] : memref<64x128xf32, #tpu.memory_space<any>> -> memref<1x128xf32, #tpu.memory_space<any>>
    %c15_i32_93 = arith.constant 15 : i32
    %c0_i32_94 = arith.constant 0 : i32
    %142 = tpu.memref_slice %arg4[%c15_i32_93, %c0_i32_94] : memref<16x128xf32, #tpu.memory_space<vmem>> -> memref<1x128xf32, #tpu.memory_space<vmem>>
    %143 = tpu.memref_slice %arg5[%c0_i32_91] : memref<1x!tpu.dma_semaphore, #tpu.memory_space<semaphore_mem>> -> memref<1x!tpu.dma_semaphore, #tpu.memory_space<semaphore_mem>>
    %144 = tpu.memref_squeeze %143 : memref<1x!tpu.dma_semaphore, #tpu.memory_space<semaphore_mem>> -> memref<!tpu.dma_semaphore, #tpu.memory_space<semaphore_mem>>
    tpu.enqueue_dma source(%141 : memref<1x128xf32, #tpu.memory_space<any>>) target(%142 : memref<1x128xf32, #tpu.memory_space<vmem>>) target_semaphore(%144 : memref<!tpu.dma_semaphore, #tpu.memory_space<semaphore_mem>>)
    %c0_i32_95 = arith.constant 0 : i32
    %c0_i32_96 = arith.constant 0 : i32
    %145 = tpu.memref_slice %arg2[%5, %c0_i32_96] : memref<64x128xf32, #tpu.memory_space<any>> -> memref<1x128xf32, #tpu.memory_space<any>>
    %c0_i32_97 = arith.constant 0 : i32
    %c0_i32_98 = arith.constant 0 : i32
    %146 = tpu.memref_slice %arg4[%c0_i32_97, %c0_i32_98] : memref<16x128xf32, #tpu.memory_space<vmem>> -> memref<1x128xf32, #tpu.memory_space<vmem>>
    %147 = tpu.memref_slice %arg5[%c0_i32_95] : memref<1x!tpu.dma_semaphore, #tpu.memory_space<semaphore_mem>> -> memref<1x!tpu.dma_semaphore, #tpu.memory_space<semaphore_mem>>
    %148 = tpu.memref_squeeze %147 : memref<1x!tpu.dma_semaphore, #tpu.memory_space<semaphore_mem>> -> memref<!tpu.dma_semaphore, #tpu.memory_space<semaphore_mem>>
    tpu.wait_dma2 semaphore(%148 : memref<!tpu.dma_semaphore, #tpu.memory_space<semaphore_mem>>) src(%145 : memref<1x128xf32, #tpu.memory_space<any>>) dst(%146 : memref<1x128xf32, #tpu.memory_space<vmem>>)
    %c0_i32_99 = arith.constant 0 : i32
    %c0_i32_100 = arith.constant 0 : i32
    %149 = tpu.memref_slice %arg2[%14, %c0_i32_100] : memref<64x128xf32, #tpu.memory_space<any>> -> memref<1x128xf32, #tpu.memory_space<any>>
    %c1_i32_101 = arith.constant 1 : i32
    %c0_i32_102 = arith.constant 0 : i32
    %150 = tpu.memref_slice %arg4[%c1_i32_101, %c0_i32_102] : memref<16x128xf32, #tpu.memory_space<vmem>> -> memref<1x128xf32, #tpu.memory_space<vmem>>
    %151 = tpu.memref_slice %arg5[%c0_i32_99] : memref<1x!tpu.dma_semaphore, #tpu.memory_space<semaphore_mem>> -> memref<1x!tpu.dma_semaphore, #tpu.memory_space<semaphore_mem>>
    %152 = tpu.memref_squeeze %151 : memref<1x!tpu.dma_semaphore, #tpu.memory_space<semaphore_mem>> -> memref<!tpu.dma_semaphore, #tpu.memory_space<semaphore_mem>>
    tpu.wait_dma2 semaphore(%152 : memref<!tpu.dma_semaphore, #tpu.memory_space<semaphore_mem>>) src(%149 : memref<1x128xf32, #tpu.memory_space<any>>) dst(%150 : memref<1x128xf32, #tpu.memory_space<vmem>>)
    %c0_i32_103 = arith.constant 0 : i32
    %c0_i32_104 = arith.constant 0 : i32
    %153 = tpu.memref_slice %arg2[%23, %c0_i32_104] : memref<64x128xf32, #tpu.memory_space<any>> -> memref<1x128xf32, #tpu.memory_space<any>>
    %c2_i32_105 = arith.constant 2 : i32
    %c0_i32_106 = arith.constant 0 : i32
    %154 = tpu.memref_slice %arg4[%c2_i32_105, %c0_i32_106] : memref<16x128xf32, #tpu.memory_space<vmem>> -> memref<1x128xf32, #tpu.memory_space<vmem>>
    %155 = tpu.memref_slice %arg5[%c0_i32_103] : memref<1x!tpu.dma_semaphore, #tpu.memory_space<semaphore_mem>> -> memref<1x!tpu.dma_semaphore, #tpu.memory_space<semaphore_mem>>
    %156 = tpu.memref_squeeze %155 : memref<1x!tpu.dma_semaphore, #tpu.memory_space<semaphore_mem>> -> memref<!tpu.dma_semaphore, #tpu.memory_space<semaphore_mem>>
    tpu.wait_dma2 semaphore(%156 : memref<!tpu.dma_semaphore, #tpu.memory_space<semaphore_mem>>) src(%153 : memref<1x128xf32, #tpu.memory_space<any>>) dst(%154 : memref<1x128xf32, #tpu.memory_space<vmem>>)
    %c0_i32_107 = arith.constant 0 : i32
    %c0_i32_108 = arith.constant 0 : i32
    %157 = tpu.memref_slice %arg2[%32, %c0_i32_108] : memref<64x128xf32, #tpu.memory_space<any>> -> memref<1x128xf32, #tpu.memory_space<any>>
    %c3_i32_109 = arith.constant 3 : i32
    %c0_i32_110 = arith.constant 0 : i32
    %158 = tpu.memref_slice %arg4[%c3_i32_109, %c0_i32_110] : memref<16x128xf32, #tpu.memory_space<vmem>> -> memref<1x128xf32, #tpu.memory_space<vmem>>
    %159 = tpu.memref_slice %arg5[%c0_i32_107] : memref<1x!tpu.dma_semaphore, #tpu.memory_space<semaphore_mem>> -> memref<1x!tpu.dma_semaphore, #tpu.memory_space<semaphore_mem>>
    %160 = tpu.memref_squeeze %159 : memref<1x!tpu.dma_semaphore, #tpu.memory_space<semaphore_mem>> -> memref<!tpu.dma_semaphore, #tpu.memory_space<semaphore_mem>>
    tpu.wait_dma2 semaphore(%160 : memref<!tpu.dma_semaphore, #tpu.memory_space<semaphore_mem>>) src(%157 : memref<1x128xf32, #tpu.memory_space<any>>) dst(%158 : memref<1x128xf32, #tpu.memory_space<vmem>>)
    %c0_i32_111 = arith.constant 0 : i32
    %c0_i32_112 = arith.constant 0 : i32
    %161 = tpu.memref_slice %arg2[%41, %c0_i32_112] : memref<64x128xf32, #tpu.memory_space<any>> -> memref<1x128xf32, #tpu.memory_space<any>>
    %c4_i32_113 = arith.constant 4 : i32
    %c0_i32_114 = arith.constant 0 : i32
    %162 = tpu.memref_slice %arg4[%c4_i32_113, %c0_i32_114] : memref<16x128xf32, #tpu.memory_space<vmem>> -> memref<1x128xf32, #tpu.memory_space<vmem>>
    %163 = tpu.memref_slice %arg5[%c0_i32_111] : memref<1x!tpu.dma_semaphore, #tpu.memory_space<semaphore_mem>> -> memref<1x!tpu.dma_semaphore, #tpu.memory_space<semaphore_mem>>
    %164 = tpu.memref_squeeze %163 : memref<1x!tpu.dma_semaphore, #tpu.memory_space<semaphore_mem>> -> memref<!tpu.dma_semaphore, #tpu.memory_space<semaphore_mem>>
    tpu.wait_dma2 semaphore(%164 : memref<!tpu.dma_semaphore, #tpu.memory_space<semaphore_mem>>) src(%161 : memref<1x128xf32, #tpu.memory_space<any>>) dst(%162 : memref<1x128xf32, #tpu.memory_space<vmem>>)
    %c0_i32_115 = arith.constant 0 : i32
    %c0_i32_116 = arith.constant 0 : i32
    %165 = tpu.memref_slice %arg2[%50, %c0_i32_116] : memref<64x128xf32, #tpu.memory_space<any>> -> memref<1x128xf32, #tpu.memory_space<any>>
    %c5_i32_117 = arith.constant 5 : i32
    %c0_i32_118 = arith.constant 0 : i32
    %166 = tpu.memref_slice %arg4[%c5_i32_117, %c0_i32_118] : memref<16x128xf32, #tpu.memory_space<vmem>> -> memref<1x128xf32, #tpu.memory_space<vmem>>
    %167 = tpu.memref_slice %arg5[%c0_i32_115] : memref<1x!tpu.dma_semaphore, #tpu.memory_space<semaphore_mem>> -> memref<1x!tpu.dma_semaphore, #tpu.memory_space<semaphore_mem>>
    %168 = tpu.memref_squeeze %167 : memref<1x!tpu.dma_semaphore, #tpu.memory_space<semaphore_mem>> -> memref<!tpu.dma_semaphore, #tpu.memory_space<semaphore_mem>>
    tpu.wait_dma2 semaphore(%168 : memref<!tpu.dma_semaphore, #tpu.memory_space<semaphore_mem>>) src(%165 : memref<1x128xf32, #tpu.memory_space<any>>) dst(%166 : memref<1x128xf32, #tpu.memory_space<vmem>>)
    %c0_i32_119 = arith.constant 0 : i32
    %c0_i32_120 = arith.constant 0 : i32
    %169 = tpu.memref_slice %arg2[%59, %c0_i32_120] : memref<64x128xf32, #tpu.memory_space<any>> -> memref<1x128xf32, #tpu.memory_space<any>>
    %c6_i32_121 = arith.constant 6 : i32
    %c0_i32_122 = arith.constant 0 : i32
    %170 = tpu.memref_slice %arg4[%c6_i32_121, %c0_i32_122] : memref<16x128xf32, #tpu.memory_space<vmem>> -> memref<1x128xf32, #tpu.memory_space<vmem>>
    %171 = tpu.memref_slice %arg5[%c0_i32_119] : memref<1x!tpu.dma_semaphore, #tpu.memory_space<semaphore_mem>> -> memref<1x!tpu.dma_semaphore, #tpu.memory_space<semaphore_mem>>
    %172 = tpu.memref_squeeze %171 : memref<1x!tpu.dma_semaphore, #tpu.memory_space<semaphore_mem>> -> memref<!tpu.dma_semaphore, #tpu.memory_space<semaphore_mem>>
    tpu.wait_dma2 semaphore(%172 : memref<!tpu.dma_semaphore, #tpu.memory_space<semaphore_mem>>) src(%169 : memref<1x128xf32, #tpu.memory_space<any>>) dst(%170 : memref<1x128xf32, #tpu.memory_space<vmem>>)
    %c0_i32_123 = arith.constant 0 : i32
    %c0_i32_124 = arith.constant 0 : i32
    %173 = tpu.memref_slice %arg2[%68, %c0_i32_124] : memref<64x128xf32, #tpu.memory_space<any>> -> memref<1x128xf32, #tpu.memory_space<any>>
    %c7_i32_125 = arith.constant 7 : i32
    %c0_i32_126 = arith.constant 0 : i32
    %174 = tpu.memref_slice %arg4[%c7_i32_125, %c0_i32_126] : memref<16x128xf32, #tpu.memory_space<vmem>> -> memref<1x128xf32, #tpu.memory_space<vmem>>
    %175 = tpu.memref_slice %arg5[%c0_i32_123] : memref<1x!tpu.dma_semaphore, #tpu.memory_space<semaphore_mem>> -> memref<1x!tpu.dma_semaphore, #tpu.memory_space<semaphore_mem>>
    %176 = tpu.memref_squeeze %175 : memref<1x!tpu.dma_semaphore, #tpu.memory_space<semaphore_mem>> -> memref<!tpu.dma_semaphore, #tpu.memory_space<semaphore_mem>>
    tpu.wait_dma2 semaphore(%176 : memref<!tpu.dma_semaphore, #tpu.memory_space<semaphore_mem>>) src(%173 : memref<1x128xf32, #tpu.memory_space<any>>) dst(%174 : memref<1x128xf32, #tpu.memory_space<vmem>>)
    %c0_i32_127 = arith.constant 0 : i32
    %c0_i32_128 = arith.constant 0 : i32
    %177 = tpu.memref_slice %arg2[%77, %c0_i32_128] : memref<64x128xf32, #tpu.memory_space<any>> -> memref<1x128xf32, #tpu.memory_space<any>>
    %c8_i32_129 = arith.constant 8 : i32
    %c0_i32_130 = arith.constant 0 : i32
    %178 = tpu.memref_slice %arg4[%c8_i32_129, %c0_i32_130] : memref<16x128xf32, #tpu.memory_space<vmem>> -> memref<1x128xf32, #tpu.memory_space<vmem>>
    %179 = tpu.memref_slice %arg5[%c0_i32_127] : memref<1x!tpu.dma_semaphore, #tpu.memory_space<semaphore_mem>> -> memref<1x!tpu.dma_semaphore, #tpu.memory_space<semaphore_mem>>
    %180 = tpu.memref_squeeze %179 : memref<1x!tpu.dma_semaphore, #tpu.memory_space<semaphore_mem>> -> memref<!tpu.dma_semaphore, #tpu.memory_space<semaphore_mem>>
    tpu.wait_dma2 semaphore(%180 : memref<!tpu.dma_semaphore, #tpu.memory_space<semaphore_mem>>) src(%177 : memref<1x128xf32, #tpu.memory_space<any>>) dst(%178 : memref<1x128xf32, #tpu.memory_space<vmem>>)
    %c0_i32_131 = arith.constant 0 : i32
    %c0_i32_132 = arith.constant 0 : i32
    %181 = tpu.memref_slice %arg2[%86, %c0_i32_132] : memref<64x128xf32, #tpu.memory_space<any>> -> memref<1x128xf32, #tpu.memory_space<any>>
    %c9_i32_133 = arith.constant 9 : i32
    %c0_i32_134 = arith.constant 0 : i32
    %182 = tpu.memref_slice %arg4[%c9_i32_133, %c0_i32_134] : memref<16x128xf32, #tpu.memory_space<vmem>> -> memref<1x128xf32, #tpu.memory_space<vmem>>
    %183 = tpu.memref_slice %arg5[%c0_i32_131] : memref<1x!tpu.dma_semaphore, #tpu.memory_space<semaphore_mem>> -> memref<1x!tpu.dma_semaphore, #tpu.memory_space<semaphore_mem>>
    %184 = tpu.memref_squeeze %183 : memref<1x!tpu.dma_semaphore, #tpu.memory_space<semaphore_mem>> -> memref<!tpu.dma_semaphore, #tpu.memory_space<semaphore_mem>>
    tpu.wait_dma2 semaphore(%184 : memref<!tpu.dma_semaphore, #tpu.memory_space<semaphore_mem>>) src(%181 : memref<1x128xf32, #tpu.memory_space<any>>) dst(%182 : memref<1x128xf32, #tpu.memory_space<vmem>>)
    %c0_i32_135 = arith.constant 0 : i32
    %c0_i32_136 = arith.constant 0 : i32
    %185 = tpu.memref_slice %arg2[%95, %c0_i32_136] : memref<64x128xf32, #tpu.memory_space<any>> -> memref<1x128xf32, #tpu.memory_space<any>>
    %c10_i32_137 = arith.constant 10 : i32
    %c0_i32_138 = arith.constant 0 : i32
    %186 = tpu.memref_slice %arg4[%c10_i32_137, %c0_i32_138] : memref<16x128xf32, #tpu.memory_space<vmem>> -> memref<1x128xf32, #tpu.memory_space<vmem>>
    %187 = tpu.memref_slice %arg5[%c0_i32_135] : memref<1x!tpu.dma_semaphore, #tpu.memory_space<semaphore_mem>> -> memref<1x!tpu.dma_semaphore, #tpu.memory_space<semaphore_mem>>
    %188 = tpu.memref_squeeze %187 : memref<1x!tpu.dma_semaphore, #tpu.memory_space<semaphore_mem>> -> memref<!tpu.dma_semaphore, #tpu.memory_space<semaphore_mem>>
    tpu.wait_dma2 semaphore(%188 : memref<!tpu.dma_semaphore, #tpu.memory_space<semaphore_mem>>) src(%185 : memref<1x128xf32, #tpu.memory_space<any>>) dst(%186 : memref<1x128xf32, #tpu.memory_space<vmem>>)
    %c0_i32_139 = arith.constant 0 : i32
    %c0_i32_140 = arith.constant 0 : i32
    %189 = tpu.memref_slice %arg2[%104, %c0_i32_140] : memref<64x128xf32, #tpu.memory_space<any>> -> memref<1x128xf32, #tpu.memory_space<any>>
    %c11_i32_141 = arith.constant 11 : i32
    %c0_i32_142 = arith.constant 0 : i32
    %190 = tpu.memref_slice %arg4[%c11_i32_141, %c0_i32_142] : memref<16x128xf32, #tpu.memory_space<vmem>> -> memref<1x128xf32, #tpu.memory_space<vmem>>
    %191 = tpu.memref_slice %arg5[%c0_i32_139] : memref<1x!tpu.dma_semaphore, #tpu.memory_space<semaphore_mem>> -> memref<1x!tpu.dma_semaphore, #tpu.memory_space<semaphore_mem>>
    %192 = tpu.memref_squeeze %191 : memref<1x!tpu.dma_semaphore, #tpu.memory_space<semaphore_mem>> -> memref<!tpu.dma_semaphore, #tpu.memory_space<semaphore_mem>>
    tpu.wait_dma2 semaphore(%192 : memref<!tpu.dma_semaphore, #tpu.memory_space<semaphore_mem>>) src(%189 : memref<1x128xf32, #tpu.memory_space<any>>) dst(%190 : memref<1x128xf32, #tpu.memory_space<vmem>>)
    %c0_i32_143 = arith.constant 0 : i32
    %c0_i32_144 = arith.constant 0 : i32
    %193 = tpu.memref_slice %arg2[%113, %c0_i32_144] : memref<64x128xf32, #tpu.memory_space<any>> -> memref<1x128xf32, #tpu.memory_space<any>>
    %c12_i32_145 = arith.constant 12 : i32
    %c0_i32_146 = arith.constant 0 : i32
    %194 = tpu.memref_slice %arg4[%c12_i32_145, %c0_i32_146] : memref<16x128xf32, #tpu.memory_space<vmem>> -> memref<1x128xf32, #tpu.memory_space<vmem>>
    %195 = tpu.memref_slice %arg5[%c0_i32_143] : memref<1x!tpu.dma_semaphore, #tpu.memory_space<semaphore_mem>> -> memref<1x!tpu.dma_semaphore, #tpu.memory_space<semaphore_mem>>
    %196 = tpu.memref_squeeze %195 : memref<1x!tpu.dma_semaphore, #tpu.memory_space<semaphore_mem>> -> memref<!tpu.dma_semaphore, #tpu.memory_space<semaphore_mem>>
    tpu.wait_dma2 semaphore(%196 : memref<!tpu.dma_semaphore, #tpu.memory_space<semaphore_mem>>) src(%193 : memref<1x128xf32, #tpu.memory_space<any>>) dst(%194 : memref<1x128xf32, #tpu.memory_space<vmem>>)
    %c0_i32_147 = arith.constant 0 : i32
    %c0_i32_148 = arith.constant 0 : i32
    %197 = tpu.memref_slice %arg2[%122, %c0_i32_148] : memref<64x128xf32, #tpu.memory_space<any>> -> memref<1x128xf32, #tpu.memory_space<any>>
    %c13_i32_149 = arith.constant 13 : i32
    %c0_i32_150 = arith.constant 0 : i32
    %198 = tpu.memref_slice %arg4[%c13_i32_149, %c0_i32_150] : memref<16x128xf32, #tpu.memory_space<vmem>> -> memref<1x128xf32, #tpu.memory_space<vmem>>
    %199 = tpu.memref_slice %arg5[%c0_i32_147] : memref<1x!tpu.dma_semaphore, #tpu.memory_space<semaphore_mem>> -> memref<1x!tpu.dma_semaphore, #tpu.memory_space<semaphore_mem>>
    %200 = tpu.memref_squeeze %199 : memref<1x!tpu.dma_semaphore, #tpu.memory_space<semaphore_mem>> -> memref<!tpu.dma_semaphore, #tpu.memory_space<semaphore_mem>>
    tpu.wait_dma2 semaphore(%200 : memref<!tpu.dma_semaphore, #tpu.memory_space<semaphore_mem>>) src(%197 : memref<1x128xf32, #tpu.memory_space<any>>) dst(%198 : memref<1x128xf32, #tpu.memory_space<vmem>>)
    %c0_i32_151 = arith.constant 0 : i32
    %c0_i32_152 = arith.constant 0 : i32
    %201 = tpu.memref_slice %arg2[%131, %c0_i32_152] : memref<64x128xf32, #tpu.memory_space<any>> -> memref<1x128xf32, #tpu.memory_space<any>>
    %c14_i32_153 = arith.constant 14 : i32
    %c0_i32_154 = arith.constant 0 : i32
    %202 = tpu.memref_slice %arg4[%c14_i32_153, %c0_i32_154] : memref<16x128xf32, #tpu.memory_space<vmem>> -> memref<1x128xf32, #tpu.memory_space<vmem>>
    %203 = tpu.memref_slice %arg5[%c0_i32_151] : memref<1x!tpu.dma_semaphore, #tpu.memory_space<semaphore_mem>> -> memref<1x!tpu.dma_semaphore, #tpu.memory_space<semaphore_mem>>
    %204 = tpu.memref_squeeze %203 : memref<1x!tpu.dma_semaphore, #tpu.memory_space<semaphore_mem>> -> memref<!tpu.dma_semaphore, #tpu.memory_space<semaphore_mem>>
    tpu.wait_dma2 semaphore(%204 : memref<!tpu.dma_semaphore, #tpu.memory_space<semaphore_mem>>) src(%201 : memref<1x128xf32, #tpu.memory_space<any>>) dst(%202 : memref<1x128xf32, #tpu.memory_space<vmem>>)
    %c0_i32_155 = arith.constant 0 : i32
    %c0_i32_156 = arith.constant 0 : i32
    %205 = tpu.memref_slice %arg2[%140, %c0_i32_156] : memref<64x128xf32, #tpu.memory_space<any>> -> memref<1x128xf32, #tpu.memory_space<any>>
    %c15_i32_157 = arith.constant 15 : i32
    %c0_i32_158 = arith.constant 0 : i32
    %206 = tpu.memref_slice %arg4[%c15_i32_157, %c0_i32_158] : memref<16x128xf32, #tpu.memory_space<vmem>> -> memref<1x128xf32, #tpu.memory_space<vmem>>
    %207 = tpu.memref_slice %arg5[%c0_i32_155] : memref<1x!tpu.dma_semaphore, #tpu.memory_space<semaphore_mem>> -> memref<1x!tpu.dma_semaphore, #tpu.memory_space<semaphore_mem>>
    %208 = tpu.memref_squeeze %207 : memref<1x!tpu.dma_semaphore, #tpu.memory_space<semaphore_mem>> -> memref<!tpu.dma_semaphore, #tpu.memory_space<semaphore_mem>>
    tpu.wait_dma2 semaphore(%208 : memref<!tpu.dma_semaphore, #tpu.memory_space<semaphore_mem>>) src(%205 : memref<1x128xf32, #tpu.memory_space<any>>) dst(%206 : memref<1x128xf32, #tpu.memory_space<vmem>>)
    %c0 = arith.constant 0 : index
    %c0_159 = arith.constant 0 : index
    %209 = vector.load %arg4[%c0, %c0_159] : memref<16x128xf32, #tpu.memory_space<vmem>>, vector<16x128xf32>
    %c0_160 = arith.constant 0 : index
    %c0_161 = arith.constant 0 : index
    %210 = vector.load %arg3[%c0_160, %c0_161] : memref<16x128xf32, #tpu.memory_space<vmem>>, vector<16x128xf32>
    tpu.vector_store %arg3[%c0_160, %c0_161], %209 {strides = array<i32>} : memref<16x128xf32, #tpu.memory_space<vmem>>, vector<16x128xf32>,
    return
  }
  func.func @transform_1(%arg0: i32, %arg1: memref<16xi32, #tpu.memory_space<smem>>) -> (i32, i32) {
    %c0_i32 = arith.constant 0 : i32
    %c0_i32_0 = arith.constant 0 : i32
    return %arg0, %c0_i32 : i32, i32
  }
}

</mosaic_0001>

<llo_original>
// kernel: tpu_custom_call.1
$region0: #{tpu_custom_call.1}
  #allocation0 [shape = 'u32[]', space=smem, size = 0x4, offset = 0x4, fixed_abs, tag = 'smem constant byte address 0x4 - core index']
  #allocation1 [shape = 'u32[72,128]{1,0:T(1,128)}', space=vmem, size = 0x9000, scoped, tag = 'internal scratch']
  #allocation2 [shape = 'f32[16,128]{1,0:T(8,128)}', space=vmem, size = 0x2000, scoped, tag = 'scratch operand']
  #allocation3 [shape = 's32[1]{0}', space=sflag, size = 0x4, scoped, tag = 'scratch operand']
  #allocation4 [shape = 's32[1]{0}', space=sflag, size = 0x4, scoped, tag = 'scoped memory for tpu_custom_call.1']
  #allocation5 [shape = 'u8[512]{0}', space=smem, size = 0x200, scoped, tag = 'prefetched SMEM operand 0']
  #allocation8 [shape = 's32[]', space=sflag, size = 0x4, offset = 0, fixed_abs, tag = 'sflag constant byte address 0x0 - dummy sync flag']
  #allocation9 [shape = 's32[]', space=sflag, size = 0x4, offset = 0, fixed_abs, tag = 'sflag constant byte address 0x0 - dummy sync flag']
  #allocation10 [shape = 'u32[]', space=smem, size = 0x4, offset = 0x44, fixed_abs, tag = 'smem constant byte address 0x44 - assertion arg 0']
  #allocation11 [shape = 'u32[]', space=smem, size = 0x4, offset = 0x48, fixed_abs, tag = 'smem constant byte address 0x48 - assertion arg 1']
  #allocation12 [shape = 's32[]', space=sflag, size = 0x4, offset = 0, fixed_abs, tag = 'sflag constant byte address 0x0 - dummy sync flag']
  #allocation13 [shape = 's32[]', space=sflag, size = 0x4, offset = 0, fixed_abs, tag = 'sflag constant byte address 0x0 - dummy sync flag']
  #allocation14 [shape = 's32[]', space=sflag, size = 0x4, offset = 0, fixed_abs, tag = 'sflag constant byte address 0x0 - dummy sync flag']
  #allocation15 [shape = 's32[]', space=sflag, size = 0x4, offset = 0, fixed_abs, tag = 'sflag constant byte address 0x0 - dummy sync flag']
  #allocation16 [shape = 's32[]', space=sflag, size = 0x4, offset = 0, fixed_abs, tag = 'sflag constant byte address 0x0 - dummy sync flag']
  #allocation17 [shape = 's32[]', space=sflag, size = 0x4, offset = 0, fixed_abs, tag = 'sflag constant byte address 0x0 - dummy sync flag']
  #allocation18 [shape = 's32[]', space=sflag, size = 0x4, offset = 0, fixed_abs, tag = 'sflag constant byte address 0x0 - dummy sync flag']
  #allocation19 [shape = 's32[]', space=sflag, size = 0x4, offset = 0, fixed_abs, tag = 'sflag constant byte address 0x0 - dummy sync flag']
  #allocation20 [shape = 's32[]', space=sflag, size = 0x4, offset = 0, fixed_abs, tag = 'sflag constant byte address 0x0 - dummy sync flag']
  #allocation21 [shape = 's32[]', space=sflag, size = 0x4, offset = 0, fixed_abs, tag = 'sflag constant byte address 0x0 - dummy sync flag']
  #allocation22 [shape = 's32[]', space=sflag, size = 0x4, offset = 0, fixed_abs, tag = 'sflag constant byte address 0x0 - dummy sync flag']
  #allocation23 [shape = 's32[]', space=sflag, size = 0x4, offset = 0, fixed_abs, tag = 'sflag constant byte address 0x0 - dummy sync flag']
  #allocation24 [shape = 's32[]', space=sflag, size = 0x4, offset = 0, fixed_abs, tag = 'sflag constant byte address 0x0 - dummy sync flag']
  #allocation25 [shape = 's32[]', space=sflag, size = 0x4, offset = 0, fixed_abs, tag = 'sflag constant byte address 0x0 - dummy sync flag']
  #allocation26 [shape = 's32[]', space=sflag, size = 0x4, offset = 0, fixed_abs, tag = 'sflag constant byte address 0x0 - dummy sync flag']
  #allocation27 [shape = 's32[]', space=sflag, size = 0x4, offset = 0, fixed_abs, tag = 'sflag constant byte address 0x0 - dummy sync flag']
  #allocation28 [shape = 's32[]', space=sflag, size = 0x4, offset = 0, fixed_abs, tag = 'sflag constant byte address 0x0 - dummy sync flag']
  #allocation29 [shape = 's32[]', space=sflag, size = 0x4, offset = 0, fixed_abs, tag = 'sflag constant byte address 0x0 - dummy sync flag']
  #allocation30 [shape = 's32[]', space=sflag, size = 0x4, offset = 0, fixed_abs, tag = 'sflag constant byte address 0x0 - dummy sync flag']
  #allocation31 [shape = 's32[]', space=sflag, size = 0x4, offset = 0, fixed_abs, tag = 'sflag constant byte address 0x0 - dummy sync flag']
  #allocation32 [shape = 's32[]', space=sflag, size = 0x4, offset = 0, fixed_abs, tag = 'sflag constant byte address 0x0 - dummy sync flag']
  #allocation33 [shape = 's32[]', space=sflag, size = 0x4, offset = 0, fixed_abs, tag = 'sflag constant byte address 0x0 - dummy sync flag']
  #allocation34 [shape = 's32[]', space=sflag, size = 0x4, offset = 0, fixed_abs, tag = 'sflag constant byte address 0x0 - dummy sync flag']
  #allocation35 [shape = 's32[]', space=sflag, size = 0x4, offset = 0, fixed_abs, tag = 'sflag constant byte address 0x0 - dummy sync flag']
  #allocation36 [shape = 's32[]', space=sflag, size = 0x4, offset = 0, fixed_abs, tag = 'sflag constant byte address 0x0 - dummy sync flag']
  #allocation37 [shape = 's32[]', space=sflag, size = 0x4, offset = 0, fixed_abs, tag = 'sflag constant byte address 0x0 - dummy sync flag']
  #allocation38 [shape = 's32[]', space=sflag, size = 0x4, offset = 0, fixed_abs, tag = 'sflag constant byte address 0x0 - dummy sync flag']
  #allocation39 [shape = 's32[]', space=sflag, size = 0x4, offset = 0, fixed_abs, tag = 'sflag constant byte address 0x0 - dummy sync flag']
  #allocation40 [shape = 's32[]', space=sflag, size = 0x4, offset = 0, fixed_abs, tag = 'sflag constant byte address 0x0 - dummy sync flag']
  #allocation41 [shape = 's32[]', space=sflag, size = 0x4, offset = 0, fixed_abs, tag = 'sflag constant byte address 0x0 - dummy sync flag']
  %s0 = inlined_call_operand.hbm [shape: s32[16], index: 0, kind: input, shape index: {}]
  %s1 = inlined_call_operand.hbm [shape: f32[64,128], index: 1, kind: input, shape index: {}]
  %s2 = inlined_call_operand.hbm [shape: f32[16,128], index: 2, kind: output, shape index: {}]
  %s3 = sld [smem:[#allocation0]]
  $region74: #{tpu_custom_call.1} parent=0
    _
  %s5 = ssub.s32 1, %s3
  %s6 = scalar_select 0, %s5, %s3
  %s8 = sshll.u32 %s0, 4
  %s9 = int_to_ptr.hbm [resolvable:$true] %s8
  %11 = dma.hbm_to_smem %s9, 16, [#allocation5], [#allocation4]
  %13 = dma.done [#allocation4], 16
  %14 = sfence
  $region1: #{tpu_custom_call.1} parent=0
    #allocation6 [shape = 'u8[8192]{0}', space=vmem, size = 0x2000, scoped, tag = 'output window, operand 0, single buffered']
    #allocation7 [shape = 's32[1]{0}', space=sflag, size = 0x4, scoped, tag = 'scoped memory for tpu_custom_call.1']
    %15 = vsyncpa [#allocation7], 0
    %s16 = smul.u32 0, 16
    %s17 = sld [smem:[#allocation5 + %s16]]
    %p18 = scmp.gt.s32.totalorder %s17, 0
    %s19 = scalar_select %p18, %s17, 0
    %p20 = scmp.lt.s32.totalorder %s19, 63
    %s21 = scalar_select %p20, %s19, 63
    %s22 = scalar_lea.hbm %s1, %s21
    // Predicated region
    $region2: #{tpu_custom_call.1} parent=1 // pred_check
      _
    $region3: #{tpu_custom_call.1} parent=1 // pred_check_branch
      %24 = sbr.rel target = $region5
    $region4: #{tpu_custom_call.1} parent=1 // pred_region
      %25 = sst [smem:[#allocation10]] [#allocation9]
      %26 = sst [smem:[#allocation11]] [#allocation8]
    $region5: #{tpu_custom_call.1} parent=1 // pred_fallthru
      _
    %28 = shalt.err (0)
    %s30 = sshll.u32 %s22, 4
    %s31 = int_to_ptr.hbm [resolvable:$true] %s30
    %s32 = sshll.u32 [#allocation2], 4
    %s33 = int_to_ptr.vmem [resolvable:$true] %s32
    %35 = dma.hbm_to_vmem [thread:$0]  %s31, 16, %s33, [#allocation3]
    %s36 = sadd.s32 %s16, 1
    %s37 = sld [smem:[#allocation5 + %s36]]
    %p38 = scmp.gt.s32.totalorder %s37, 0
    %s39 = scalar_select %p38, %s37, 0
    %p40 = scmp.lt.s32.totalorder %s39, 63
    %s41 = scalar_select %p40, %s39, 63
    %s42 = scalar_lea.hbm %s1, %s41
    %s43 = scalar_lea.vmem [#allocation2], 1
    // Predicated region
    $region6: #{tpu_custom_call.1} parent=1 // pred_check
      _
    $region7: #{tpu_custom_call.1} parent=1 // pred_check_branch
      %45 = sbr.rel target = $region9
    $region8: #{tpu_custom_call.1} parent=1 // pred_region
      %46 = sst [smem:[#allocation10]] [#allocation13]
      %47 = sst [smem:[#allocation11]] [#allocation12]
    $region9: #{tpu_custom_call.1} parent=1 // pred_fallthru
      _
    %49 = shalt.err (0)
    %s51 = sshll.u32 %s42, 4
    %s52 = int_to_ptr.hbm [resolvable:$true] %s51
    %s53 = sshll.u32 %s43, 4
    %s54 = int_to_ptr.vmem [resolvable:$true] %s53
    %56 = dma.hbm_to_vmem [thread:$0]  %s52, 16, %s54, [#allocation3]
    %s57 = sadd.s32 %s16, 2
    %s58 = sld [smem:[#allocation5 + %s57]]
    %p59 = scmp.gt.s32.totalorder %s58, 0
    %s60 = scalar_select %p59, %s58, 0
    %p61 = scmp.lt.s32.totalorder %s60, 63
    %s62 = scalar_select %p61, %s60, 63
    %s63 = scalar_lea.hbm %s1, %s62
    %s64 = scalar_lea.vmem [#allocation2], 2
    // Predicated region
    $region10: #{tpu_custom_call.1} parent=1 // pred_check
      _
    $region11: #{tpu_custom_call.1} parent=1 // pred_check_branch
      %66 = sbr.rel target = $region13
    $region12: #{tpu_custom_call.1} parent=1 // pred_region
      %67 = sst [smem:[#allocation10]] [#allocation15]
      %68 = sst [smem:[#allocation11]] [#allocation14]
    $region13: #{tpu_custom_call.1} parent=1 // pred_fallthru
      _
    %70 = shalt.err (0)
    %s72 = sshll.u32 %s63, 4
    %s73 = int_to_ptr.hbm [resolvable:$true] %s72
    %s74 = sshll.u32 %s64, 4
    %s75 = int_to_ptr.vmem [resolvable:$true] %s74
    %77 = dma.hbm_to_vmem [thread:$0]  %s73, 16, %s75, [#allocation3]
    %s78 = sadd.s32 %s16, 3
    %s79 = sld [smem:[#allocation5 + %s78]]
    %p80 = scmp.gt.s32.totalorder %s79, 0
    %s81 = scalar_select %p80, %s79, 0
    %p82 = scmp.lt.s32.totalorder %s81, 63
    %s83 = scalar_select %p82, %s81, 63
    %s84 = scalar_lea.hbm %s1, %s83
    %s85 = scalar_lea.vmem [#allocation2], 3
    // Predicated region
    $region14: #{tpu_custom_call.1} parent=1 // pred_check
      _
    $region15: #{tpu_custom_call.1} parent=1 // pred_check_branch
      %87 = sbr.rel target = $region17
    $region16: #{tpu_custom_call.1} parent=1 // pred_region
      %88 = sst [smem:[#allocation10]] [#allocation17]
      %89 = sst [smem:[#allocation11]] [#allocation16]
    $region17: #{tpu_custom_call.1} parent=1 // pred_fallthru
      _
    %91 = shalt.err (0)
    %s93 = sshll.u32 %s84, 4
    %s94 = int_to_ptr.hbm [resolvable:$true] %s93
    %s95 = sshll.u32 %s85, 4
    %s96 = int_to_ptr.vmem [resolvable:$true] %s95
    %98 = dma.hbm_to_vmem [thread:$0]  %s94, 16, %s96, [#allocation3]
    %s99 = sadd.s32 %s16, 4
    %s100 = sld [smem:[#allocation5 + %s99]]
    %p101 = scmp.gt.s32.totalorder %s100, 0
    %s102 = scalar_select %p101, %s100, 0
    %p103 = scmp.lt.s32.totalorder %s102, 63
    %s104 = scalar_select %p103, %s102, 63
    %s105 = scalar_lea.hbm %s1, %s104
    %s106 = scalar_lea.vmem [#allocation2], 4
    // Predicated region
    $region18: #{tpu_custom_call.1} parent=1 // pred_check
      _
    $region19: #{tpu_custom_call.1} parent=1 // pred_check_branch
      %108 = sbr.rel target = $region21
    $region20: #{tpu_custom_call.1} parent=1 // pred_region
      %109 = sst [smem:[#allocation10]] [#allocation19]
      %110 = sst [smem:[#allocation11]] [#allocation18]
    $region21: #{tpu_custom_call.1} parent=1 // pred_fallthru
      _
    %112 = shalt.err (0)
    %s114 = sshll.u32 %s105, 4
    %s115 = int_to_ptr.hbm [resolvable:$true] %s114
    %s116 = sshll.u32 %s106, 4
    %s117 = int_to_ptr.vmem [resolvable:$true] %s116
    %119 = dma.hbm_to_vmem [thread:$0]  %s115, 16, %s117, [#allocation3]
    %s120 = sadd.s32 %s16, 5
    %s121 = sld [smem:[#allocation5 + %s120]]
    %p122 = scmp.gt.s32.totalorder %s121, 0
    %s123 = scalar_select %p122, %s121, 0
    %p124 = scmp.lt.s32.totalorder %s123, 63
    %s125 = scalar_select %p124, %s123, 63
    %s126 = scalar_lea.hbm %s1, %s125
    %s127 = scalar_lea.vmem [#allocation2], 5
    // Predicated region
    $region22: #{tpu_custom_call.1} parent=1 // pred_check
      _
    $region23: #{tpu_custom_call.1} parent=1 // pred_check_branch
      %129 = sbr.rel target = $region25
    $region24: #{tpu_custom_call.1} parent=1 // pred_region
      %130 = sst [smem:[#allocation10]] [#allocation21]
      %131 = sst [smem:[#allocation11]] [#allocation20]
    $region25: #{tpu_custom_call.1} parent=1 // pred_fallthru
      _
    %133 = shalt.err (0)
    %s135 = sshll.u32 %s126, 4
    %s136 = int_to_ptr.hbm [resolvable:$true] %s135
    %s137 = sshll.u32 %s127, 4
    %s138 = int_to_ptr.vmem [resolvable:$true] %s137
    %140 = dma.hbm_to_vmem [thread:$0]  %s136, 16, %s138, [#allocation3]
    %s141 = sadd.s32 %s16, 6
    %s142 = sld [smem:[#allocation5 + %s141]]
    %p143 = scmp.gt.s32.totalorder %s142, 0
    %s144 = scalar_select %p143, %s142, 0
    %p145 = scmp.lt.s32.totalorder %s144, 63
    %s146 = scalar_select %p145, %s144, 63
    %s147 = scalar_lea.hbm %s1, %s146
    %s148 = scalar_lea.vmem [#allocation2], 6
    // Predicated region
    $region26: #{tpu_custom_call.1} parent=1 // pred_check
      _
    $region27: #{tpu_custom_call.1} parent=1 // pred_check_branch
      %150 = sbr.rel target = $region29
    $region28: #{tpu_custom_call.1} parent=1 // pred_region
      %151 = sst [smem:[#allocation10]] [#allocation23]
      %152 = sst [smem:[#allocation11]] [#allocation22]
    $region29: #{tpu_custom_call.1} parent=1 // pred_fallthru
      _
    %154 = shalt.err (0)
    %s156 = sshll.u32 %s147, 4
    %s157 = int_to_ptr.hbm [resolvable:$true] %s156
    %s158 = sshll.u32 %s148, 4
    %s159 = int_to_ptr.vmem [resolvable:$true] %s158
    %161 = dma.hbm_to_vmem [thread:$0]  %s157, 16, %s159, [#allocation3]
    %s162 = sadd.s32 %s16, 7
    %s163 = sld [smem:[#allocation5 + %s162]]
    %p164 = scmp.gt.s32.totalorder %s163, 0
    %s165 = scalar_select %p164, %s163, 0
    %p166 = scmp.lt.s32.totalorder %s165, 63
    %s167 = scalar_select %p166, %s165, 63
    %s168 = scalar_lea.hbm %s1, %s167
    %s169 = scalar_lea.vmem [#allocation2], 7
    // Predicated region
    $region30: #{tpu_custom_call.1} parent=1 // pred_check
      _
    $region31: #{tpu_custom_call.1} parent=1 // pred_check_branch
      %171 = sbr.rel target = $region33
    $region32: #{tpu_custom_call.1} parent=1 // pred_region
      %172 = sst [smem:[#allocation10]] [#allocation25]
      %173 = sst [smem:[#allocation11]] [#allocation24]
    $region33: #{tpu_custom_call.1} parent=1 // pred_fallthru
      _
    %175 = shalt.err (0)
    %s177 = sshll.u32 %s168, 4
    %s178 = int_to_ptr.hbm [resolvable:$true] %s177
    %s179 = sshll.u32 %s169, 4
    %s180 = int_to_ptr.vmem [resolvable:$true] %s179
    %182 = dma.hbm_to_vmem [thread:$0]  %s178, 16, %s180, [#allocation3]
    %s183 = sadd.s32 %s16, 8
    %s184 = sld [smem:[#allocation5 + %s183]]
    %p185 = scmp.gt.s32.totalorder %s184, 0
    %s186 = scalar_select %p185, %s184, 0
    %p187 = scmp.lt.s32.totalorder %s186, 63
    %s188 = scalar_select %p187, %s186, 63
    %s189 = scalar_lea.hbm %s1, %s188
    %s190 = scalar_lea.vmem [#allocation2], 8
    // Predicated region
    $region34: #{tpu_custom_call.1} parent=1 // pred_check
      _
    $region35: #{tpu_custom_call.1} parent=1 // pred_check_branch
      %192 = sbr.rel target = $region37
    $region36: #{tpu_custom_call.1} parent=1 // pred_region
      %193 = sst [smem:[#allocation10]] [#allocation27]
      %194 = sst [smem:[#allocation11]] [#allocation26]
    $region37: #{tpu_custom_call.1} parent=1 // pred_fallthru
      _
    %196 = shalt.err (0)
    %s198 = sshll.u32 %s189, 4
    %s199 = int_to_ptr.hbm [resolvable:$true] %s198
    %s200 = sshll.u32 %s190, 4
    %s201 = int_to_ptr.vmem [resolvable:$true] %s200
    %203 = dma.hbm_to_vmem [thread:$0]  %s199, 16, %s201, [#allocation3]
    %s204 = sadd.s32 %s16, 9
    %s205 = sld [smem:[#allocation5 + %s204]]
    %p206 = scmp.gt.s32.totalorder %s205, 0
    %s207 = scalar_select %p206, %s205, 0
    %p208 = scmp.lt.s32.totalorder %s207, 63
    %s209 = scalar_select %p208, %s207, 63
    %s210 = scalar_lea.hbm %s1, %s209
    %s211 = scalar_lea.vmem [#allocation2], 9
    // Predicated region
    $region38: #{tpu_custom_call.1} parent=1 // pred_check
      _
    $region39: #{tpu_custom_call.1} parent=1 // pred_check_branch
      %213 = sbr.rel target = $region41
    $region40: #{tpu_custom_call.1} parent=1 // pred_region
      %214 = sst [smem:[#allocation10]] [#allocation29]
      %215 = sst [smem:[#allocation11]] [#allocation28]
    $region41: #{tpu_custom_call.1} parent=1 // pred_fallthru
      _
    %217 = shalt.err (0)
    %s219 = sshll.u32 %s210, 4
    %s220 = int_to_ptr.hbm [resolvable:$true] %s219
    %s221 = sshll.u32 %s211, 4
    %s222 = int_to_ptr.vmem [resolvable:$true] %s221
    %224 = dma.hbm_to_vmem [thread:$0]  %s220, 16, %s222, [#allocation3]
    %s225 = sadd.s32 %s16, 10
    %s226 = sld [smem:[#allocation5 + %s225]]
    %p227 = scmp.gt.s32.totalorder %s226, 0
    %s228 = scalar_select %p227, %s226, 0
    %p229 = scmp.lt.s32.totalorder %s228, 63
    %s230 = scalar_select %p229, %s228, 63
    %s231 = scalar_lea.hbm %s1, %s230
    %s232 = scalar_lea.vmem [#allocation2], 10
    // Predicated region
    $region42: #{tpu_custom_call.1} parent=1 // pred_check
      _
    $region43: #{tpu_custom_call.1} parent=1 // pred_check_branch
      %234 = sbr.rel target = $region45
    $region44: #{tpu_custom_call.1} parent=1 // pred_region
      %235 = sst [smem:[#allocation10]] [#allocation31]
      %236 = sst [smem:[#allocation11]] [#allocation30]
    $region45: #{tpu_custom_call.1} parent=1 // pred_fallthru
      _
    %238 = shalt.err (0)
    %s240 = sshll.u32 %s231, 4
    %s241 = int_to_ptr.hbm [resolvable:$true] %s240
    %s242 = sshll.u32 %s232, 4
    %s243 = int_to_ptr.vmem [resolvable:$true] %s242
    %245 = dma.hbm_to_vmem [thread:$0]  %s241, 16, %s243, [#allocation3]
    %s246 = sadd.s32 %s16, 11
    %s247 = sld [smem:[#allocation5 + %s246]]
    %p248 = scmp.gt.s32.totalorder %s247, 0
    %s249 = scalar_select %p248, %s247, 0
    %p250 = scmp.lt.s32.totalorder %s249, 63
    %s251 = scalar_select %p250, %s249, 63
    %s252 = scalar_lea.hbm %s1, %s251
    %s253 = scalar_lea.vmem [#allocation2], 11
    // Predicated region
    $region46: #{tpu_custom_call.1} parent=1 // pred_check
      _
    $region47: #{tpu_custom_call.1} parent=1 // pred_check_branch
      %255 = sbr.rel target = $region49
    $region48: #{tpu_custom_call.1} parent=1 // pred_region
      %256 = sst [smem:[#allocation10]] [#allocation33]
      %257 = sst [smem:[#allocation11]] [#allocation32]
    $region49: #{tpu_custom_call.1} parent=1 // pred_fallthru
      _
    %259 = shalt.err (0)
    %s261 = sshll.u32 %s252, 4
    %s262 = int_to_ptr.hbm [resolvable:$true] %s261
    %s263 = sshll.u32 %s253, 4
    %s264 = int_to_ptr.vmem [resolvable:$true] %s263
    %266 = dma.hbm_to_vmem [thread:$0]  %s262, 16, %s264, [#allocation3]
    %s267 = sadd.s32 %s16, 12
    %s268 = sld [smem:[#allocation5 + %s267]]
    %p269 = scmp.gt.s32.totalorder %s268, 0
    %s270 = scalar_select %p269, %s268, 0
    %p271 = scmp.lt.s32.totalorder %s270, 63
    %s272 = scalar_select %p271, %s270, 63
    %s273 = scalar_lea.hbm %s1, %s272
    %s274 = scalar_lea.vmem [#allocation2], 12
    // Predicated region
    $region50: #{tpu_custom_call.1} parent=1 // pred_check
      _
    $region51: #{tpu_custom_call.1} parent=1 // pred_check_branch
      %276 = sbr.rel target = $region53
    $region52: #{tpu_custom_call.1} parent=1 // pred_region
      %277 = sst [smem:[#allocation10]] [#allocation35]
      %278 = sst [smem:[#allocation11]] [#allocation34]
    $region53: #{tpu_custom_call.1} parent=1 // pred_fallthru
      _
    %280 = shalt.err (0)
    %s282 = sshll.u32 %s273, 4
    %s283 = int_to_ptr.hbm [resolvable:$true] %s282
    %s284 = sshll.u32 %s274, 4
    %s285 = int_to_ptr.vmem [resolvable:$true] %s284
    %287 = dma.hbm_to_vmem [thread:$0]  %s283, 16, %s285, [#allocation3]
    %s288 = sadd.s32 %s16, 13
    %s289 = sld [smem:[#allocation5 + %s288]]
    %p290 = scmp.gt.s32.totalorder %s289, 0
    %s291 = scalar_select %p290, %s289, 0
    %p292 = scmp.lt.s32.totalorder %s291, 63
    %s293 = scalar_select %p292, %s291, 63
    %s294 = scalar_lea.hbm %s1, %s293
    %s295 = scalar_lea.vmem [#allocation2], 13
    // Predicated region
    $region54: #{tpu_custom_call.1} parent=1 // pred_check
      _
    $region55: #{tpu_custom_call.1} parent=1 // pred_check_branch
      %297 = sbr.rel target = $region57
    $region56: #{tpu_custom_call.1} parent=1 // pred_region
      %298 = sst [smem:[#allocation10]] [#allocation37]
      %299 = sst [smem:[#allocation11]] [#allocation36]
    $region57: #{tpu_custom_call.1} parent=1 // pred_fallthru
      _
    %301 = shalt.err (0)
    %s303 = sshll.u32 %s294, 4
    %s304 = int_to_ptr.hbm [resolvable:$true] %s303
    %s305 = sshll.u32 %s295, 4
    %s306 = int_to_ptr.vmem [resolvable:$true] %s305
    %308 = dma.hbm_to_vmem [thread:$0]  %s304, 16, %s306, [#allocation3]
    %s309 = sadd.s32 %s16, 14
    %s310 = sld [smem:[#allocation5 + %s309]]
    %p311 = scmp.gt.s32.totalorder %s310, 0
    %s312 = scalar_select %p311, %s310, 0
    %p313 = scmp.lt.s32.totalorder %s312, 63
    %s314 = scalar_select %p313, %s312, 63
    %s315 = scalar_lea.hbm %s1, %s314
    %s316 = scalar_lea.vmem [#allocation2], 14
    // Predicated region
    $region58: #{tpu_custom_call.1} parent=1 // pred_check
      _
    $region59: #{tpu_custom_call.1} parent=1 // pred_check_branch
      %318 = sbr.rel target = $region61
    $region60: #{tpu_custom_call.1} parent=1 // pred_region
      %319 = sst [smem:[#allocation10]] [#allocation39]
      %320 = sst [smem:[#allocation11]] [#allocation38]
    $region61: #{tpu_custom_call.1} parent=1 // pred_fallthru
      _
    %322 = shalt.err (0)
    %s324 = sshll.u32 %s315, 4
    %s325 = int_to_ptr.hbm [resolvable:$true] %s324
    %s326 = sshll.u32 %s316, 4
    %s327 = int_to_ptr.vmem [resolvable:$true] %s326
    %329 = dma.hbm_to_vmem [thread:$0]  %s325, 16, %s327, [#allocation3]
    %s330 = sadd.s32 %s16, 15
    %s331 = sld [smem:[#allocation5 + %s330]]
    %p332 = scmp.gt.s32.totalorder %s331, 0
    %s333 = scalar_select %p332, %s331, 0
    %p334 = scmp.lt.s32.totalorder %s333, 63
    %s335 = scalar_select %p334, %s333, 63
    %s336 = scalar_lea.hbm %s1, %s335
    %s337 = scalar_lea.vmem [#allocation2], 15
    // Predicated region
    $region62: #{tpu_custom_call.1} parent=1 // pred_check
      _
    $region63: #{tpu_custom_call.1} parent=1 // pred_check_branch
      %339 = sbr.rel target = $region65
    $region64: #{tpu_custom_call.1} parent=1 // pred_region
      %340 = sst [smem:[#allocation10]] [#allocation41]
      %341 = sst [smem:[#allocation11]] [#allocation40]
    $region65: #{tpu_custom_call.1} parent=1 // pred_fallthru
      _
    %343 = shalt.err (0)
    %s345 = sshll.u32 %s336, 4
    %s346 = int_to_ptr.hbm [resolvable:$true] %s345
    %s347 = sshll.u32 %s337, 4
    %s348 = int_to_ptr.vmem [resolvable:$true] %s347
    %350 = dma.hbm_to_vmem [thread:$0]  %s346, 16, %s348, [#allocation3]
    %s351 = smul.u32 1, 1
    %s352 = sshll.u32 %s351, 4
    %353 = dma.done [#allocation3], %s352
    %s354 = sshll.u32 %s351, 4
    %355 = dma.done [#allocation3], %s354
    %s356 = sshll.u32 %s351, 4
    %357 = dma.done [#allocation3], %s356
    %s358 = sshll.u32 %s351, 4
    %359 = dma.done [#allocation3], %s358
    %s360 = sshll.u32 %s351, 4
    %361 = dma.done [#allocation3], %s360
    %s362 = sshll.u32 %s351, 4
    %363 = dma.done [#allocation3], %s362
    %s364 = sshll.u32 %s351, 4
    %365 = dma.done [#allocation3], %s364
    %s366 = sshll.u32 %s351, 4
    %367 = dma.done [#allocation3], %s366
    %s368 = sshll.u32 %s351, 4
    %369 = dma.done [#allocation3], %s368
    %s370 = sshll.u32 %s351, 4
    %371 = dma.done [#allocation3], %s370
    %s372 = sshll.u32 %s351, 4
    %373 = dma.done [#allocation3], %s372
    %s374 = sshll.u32 %s351, 4
    %375 = dma.done [#allocation3], %s374
    %s376 = sshll.u32 %s351, 4
    %377 = dma.done [#allocation3], %s376
    %s378 = sshll.u32 %s351, 4
    %379 = dma.done [#allocation3], %s378
    %s380 = sshll.u32 %s351, 4
    %381 = dma.done [#allocation3], %s380
    %s382 = sshll.u32 %s351, 4
    %383 = dma.done [#allocation3], %s382
    %v384 = vld [vmem:[#allocation2] sm:$0xff]
    %v385 = vld [vmem:[#allocation2 + $0x8] sm:$0xff]
    %386 = vst [vmem:[#allocation6] sm:$0xff] %v384
    %387 = vst [vmem:[#allocation6 + $0x8] sm:$0xff] %v385
    // Predicated region
    $region66: #{tpu_custom_call.1} parent=1 // pred_check
      _
    $region67: #{tpu_custom_call.1} parent=1 // pred_check_branch
      %389 = sbr.rel (0) target = $region69
    $region68: #{tpu_custom_call.1} parent=1 // pred_region
      %391 = vsyncadd [#allocation7], 0
      %s392 = sshll.u32 [#allocation6], 4
      %s393 = int_to_ptr.vmem [resolvable:$true] %s392
      %s394 = sshll.u32 %s2, 4
      %s395 = int_to_ptr.hbm [resolvable:$true] %s394
      %400 = dma.vmem_to_hbm [thread:$0]  %s393, 256, %s395, [#allocation7], 128, 128, 8
    $region69: #{tpu_custom_call.1} parent=1 // pred_fallthru
      _
    // Predicated region
    $region70: #{tpu_custom_call.1} parent=1 // pred_check
      _
    $region71: #{tpu_custom_call.1} parent=1 // pred_check_branch
      %402 = sbr.rel (0) target = $region73
    $region72: #{tpu_custom_call.1} parent=1 // pred_region
      %404 = dma.done [#allocation7], 256
    $region73: #{tpu_custom_call.1} parent=1 // pred_fallthru
      _
    %405 = vsyncpa [#allocation7], 1
  %406 = vsyncmov [#allocation3]
  %s407 = vpop.sfrf %406
  %p408 = scmp.eq.s32.totalorder %s407, 0
  %p409 = pneg %p408
  %411 = shalt.err (%p409)

</llo_original>
